<compile_context>
chip_gen: v7x
topology: tpu7x:2x2x1
jax: 0.10.0
libtpu: 0.0.40
codegen_flags: <defaults>
</compile_context>

<pallas_src>
import jax
import jax.numpy as jnp
from jax.experimental import pallas as pl
from jax.experimental.pallas import tpu as pltpu

LANE = 128


def _round_up(x, m):
    return (x + m - 1) // m * m


# --------------------------------------------------------------------------
# Fused kernel: one (row-tile i, contraction-tile k) step of
#   out = PReLU(adj @ (seq @ W) + bias)
# --------------------------------------------------------------------------
def gcn_kernel(adj_ref, seq_ref, w_ref, bias_ref, alpha_ref, out_ref, acc_ref):
    k = pl.program_id(1)

    @pl.when(k == 0)
    def _init():
        acc_ref[...] = jnp.zeros_like(acc_ref)

    # seq_fts tile for this contraction block, recomputed in-kernel (cheaper
    # than the HBM round-trip of a lane-padded f32 intermediate).
    fts = jnp.dot(seq_ref[...], w_ref[...], preferred_element_type=jnp.float32)
    acc_ref[...] += jnp.dot(
        adj_ref[...], fts.astype(adj_ref.dtype),
        preferred_element_type=jnp.float32)

    @pl.when(k == pl.num_programs(1) - 1)
    def _epilogue():
        alpha = alpha_ref[0, 0]                       # scalar PReLU slope (SMEM)
        out = acc_ref[...] + bias_ref[...]            # broadcast over rows
        out_ref[...] = jnp.where(out > 0, out, alpha * out).astype(out_ref.dtype)


def gcn_forward(seq, w, adj, bias, alpha, *, tm=512, tk=512, adj_dtype=None):
    """seq: (N, in_ft), w: (in_ft, out_ft) [Linear weight transposed],
    adj: (N, N), bias: (1, out_ft), alpha: (1, 1).
    Returns PReLU(adj @ (seq @ w) + bias), shape (N, out_ft), f32."""
    N, in_ft = seq.shape
    out_ft = w.shape[1]

    # Lane-dense feature dim: zero-pad W / bias columns up to a multiple of 128.
    out_ft_p = _round_up(out_ft, LANE)
    if out_ft_p != out_ft:
        w = jnp.pad(w, ((0, 0), (0, out_ft_p - out_ft)))
        bias = jnp.pad(bias, ((0, 0), (0, out_ft_p - out_ft)))

    # Row (output) tile: cap so the "parallel" axis has >=2 steps when tiles
    # can stay >=256 rows (v7x megacore); single full-dim tile otherwise.
    tm = min(tm, _round_up(pl.cdiv(N, 2), 256))
    if tm >= N:
        tm = N                                  # full-dim block (always legal)
    else:
        tm = max(8, (tm // 8) * 8)              # sublane-aligned row tile

    # Contraction tile: multiple of 128; zero-pad the contraction dim so tiles
    # divide it exactly (zero adj columns / zero seq rows contribute nothing).
    tk = min(tk, N)
    if tk >= N:
        tk, nk = N, N
    else:
        tk = max(LANE, (tk // LANE) * LANE)
        nk = _round_up(N, tk)
        if nk != N:
            adj = jnp.pad(adj, ((0, 0), (0, nk - N)))
            seq = jnp.pad(seq, ((0, nk - N), (0, 0)))

    if adj_dtype is not None and adj.dtype != adj_dtype:
        # Optional perf/accuracy trade: halve streamed adj bytes (HBM-bound).
        adj = adj.astype(adj_dtype)

    grid = (pl.cdiv(N, tm), nk // tk)

    out_p = pl.pallas_call(
        gcn_kernel,
        out_shape=jax.ShapeDtypeStruct((N, out_ft_p), jnp.float32),
        grid=grid,
        in_specs=[
            pl.BlockSpec((tm, tk), lambda i, k: (i, k)),            # adj (streamed)
            pl.BlockSpec((tk, in_ft), lambda i, k: (k, 0)),         # seq (per-k)
            pl.BlockSpec((in_ft, out_ft_p), lambda i, k: (0, 0)),   # W (resident)
            pl.BlockSpec((1, out_ft_p), lambda i, k: (0, 0)),       # bias (resident)
            pl.BlockSpec((1, 1), lambda i, k: (0, 0),
                         memory_space=pltpu.MemorySpace.SMEM),      # alpha scalar
        ],
        out_specs=pl.BlockSpec((tm, out_ft_p), lambda i, k: (i, 0)),
        scratch_shapes=[pltpu.VMEM((tm, out_ft_p), jnp.float32)],
        compiler_params=pltpu.CompilerParams(
            dimension_semantics=("parallel", "arbitrary"),
            vmem_limit_bytes=48 * 1024 * 1024,
        ),
    )(adj, seq, w, bias, alpha)

    # Strip the lane padding (padded W/bias columns are zero -> PReLU(0)=0).
    return out_p[:, :out_ft]


def gcn_reference(seq, w, adj, bias, alpha):
    seq_fts = seq @ w
    out = adj @ seq_fts + bias
    a = alpha[0, 0]
    return jnp.where(out > 0, out, a * out)


def _make_inputs(key, n, in_ft, out_ft):
    k_seq, k_adj, k_w = jax.random.split(key, 3)
    seq = jax.random.normal(k_seq, (n, in_ft), dtype=jnp.float32)
    # Row-normalized random adjacency (deterministic).
    adj_raw = (jax.random.uniform(k_adj, (n, n)) < 0.1).astype(jnp.float32)
    adj_raw = adj_raw + jnp.eye(n, dtype=jnp.float32)
    adj = adj_raw / jnp.sum(adj_raw, axis=1, keepdims=True)
    # Xavier-uniform Linear weight, stored transposed: (in_ft, out_ft).
    limit = (6.0 / (in_ft + out_ft)) ** 0.5
    w = jax.random.uniform(k_w, (in_ft, out_ft), minval=-limit, maxval=limit,
                           dtype=jnp.float32)
    bias = jnp.zeros((1, out_ft), dtype=jnp.float32)      # GCN bias init 0.0
    alpha = jnp.full((1, 1), 0.25, dtype=jnp.float32)     # PReLU default slope
    return seq, w, adj, bias, alpha


if __name__ == "__main__":
    key = jax.random.PRNGKey(0)
    k1, k2 = jax.random.split(key)

    # Small shapes consistent with the module: N nodes, in_ft -> out_ft.
    N, in_ft, out_ft = 128, 64, 32
    seq, w, adj, bias, alpha = _make_inputs(k1, N, in_ft, out_ft)
    out = jax.block_until_ready(gcn_forward(seq, w, adj, bias, alpha))
    ref = gcn_reference(seq, w, adj, bias, alpha)
    assert out.shape == (N, out_ft)
    assert jnp.allclose(out, ref, atol=1e-5, rtol=1e-5)

    # Second check exercising the K-tiled accumulator path (grid = (3, 3)).
    N2 = 384
    seq2, w2, adj2, bias2, alpha2 = _make_inputs(k2, N2, in_ft, out_ft)
    out2 = jax.block_until_ready(
        gcn_forward(seq2, w2, adj2, bias2, alpha2, tm=128, tk=128))
    ref2 = gcn_reference(seq2, w2, adj2, bias2, alpha2)
    assert out2.shape == (N2, out_ft)
    assert jnp.allclose(out2, ref2, atol=1e-5, rtol=1e-5)

    print("KERNEL_OK")
</pallas_src>

<mosaic_0001>
module attributes {stable_mosaic.version = 11 : i64} {
  func.func @gcn_kernel(%arg0: i32, %arg1: i32, %arg2: memref<128x128xf32, #tpu.memory_space<vmem>>, %arg3: memref<128x64xf32, #tpu.memory_space<vmem>>, %arg4: memref<64x128xf32, #tpu.memory_space<vmem>>, %arg5: memref<1x128xf32, #tpu.memory_space<vmem>>, %arg6: memref<1x1xf32, #tpu.memory_space<smem>>, %arg7: memref<128x128xf32, #tpu.memory_space<vmem>>, %arg8: memref<128x128xf32, #tpu.memory_space<vmem>>) attributes {dimension_semantics = [#tpu.dimension_semantics<parallel>, #tpu.dimension_semantics<arbitrary>], iteration_bounds = array<i64: 1, 1>, scalar_prefetch = 0 : i64, scratch_operands = 1 : i64, tpu.core_type = #tpu.core_type<tc>, window_params = [{transform_indices = @transform_0, window_bounds = array<i64: 128, 128>}, {transform_indices = @transform_1, window_bounds = array<i64: 128, 64>}, {pipeline_mode = #tpu.pipeline_mode<synchronous>, transform_indices = @transform_2, window_bounds = array<i64: 64, 128>}, {pipeline_mode = #tpu.pipeline_mode<synchronous>, transform_indices = @transform_3, window_bounds = array<i64: 1, 128>}, {transform_indices = @transform_4, window_bounds = array<i64: 1, 1>}, {transform_indices = @transform_5, window_bounds = array<i64: 128, 128>}]} {
    %c0_i32 = arith.constant 0 : i32
    %0 = arith.cmpi eq, %arg1, %c0_i32 : i32
    %1 = arith.extui %0 : i1 to i32
    %c0_i32_0 = arith.constant 0 : i32
    %2 = arith.cmpi ne, %1, %c0_i32_0 : i32
    scf.if %2 {
      %cst_13 = arith.constant 0.000000e+00 : f32
      %14 = vector.broadcast %cst_13 : f32 to vector<128x128xf32>
      %c0_14 = arith.constant 0 : index
      %c0_15 = arith.constant 0 : index
      %15 = vector.load %arg8[%c0_14, %c0_15] : memref<128x128xf32, #tpu.memory_space<vmem>>, vector<128x128xf32>
      tpu.vector_store %arg8[%c0_14, %c0_15], %14 {strides = array<i32>} : memref<128x128xf32, #tpu.memory_space<vmem>>, vector<128x128xf32>,
    } else {
    }
    %c0 = arith.constant 0 : index
    %c0_1 = arith.constant 0 : index
    %3 = vector.load %arg3[%c0, %c0_1] : memref<128x64xf32, #tpu.memory_space<vmem>>, vector<128x64xf32>
    %c0_2 = arith.constant 0 : index
    %c0_3 = arith.constant 0 : index
    %4 = vector.load %arg4[%c0_2, %c0_3] : memref<64x128xf32, #tpu.memory_space<vmem>>, vector<64x128xf32>
    %cst = arith.constant dense<0.000000e+00> : vector<128x128xf32>
    %5 = tpu.matmul %3, %4, %cst {dimension_numbers = #tpu.dot_dimension_numbers<[1], [0], [0], [1], [0, 0, 1, 1], [], []>} : vector<128x64xf32>, vector<64x128xf32>, vector<128x128xf32> -> vector<128x128xf32>
    %c0_4 = arith.constant 0 : index
    %c0_5 = arith.constant 0 : index
    %6 = vector.load %arg8[%c0_4, %c0_5] : memref<128x128xf32, #tpu.memory_space<vmem>>, vector<128x128xf32>
    %c0_6 = arith.constant 0 : index
    %c0_7 = arith.constant 0 : index
    %7 = vector.load %arg2[%c0_6, %c0_7] : memref<128x128xf32, #tpu.memory_space<vmem>>, vector<128x128xf32>
    %cst_8 = arith.constant dense<0.000000e+00> : vector<128x128xf32>
    %8 = tpu.matmul %7, %5, %cst_8 {dimension_numbers = #tpu.dot_dimension_numbers<[1], [0], [0], [1], [0, 0, 1, 1], [], []>} : vector<128x128xf32>, vector<128x128xf32>, vector<128x128xf32> -> vector<128x128xf32>
    %9 = arith.addf %6, %8 : vector<128x128xf32>
    %c0_9 = arith.constant 0 : index
    %c0_10 = arith.constant 0 : index
    %10 = vector.load %arg8[%c0_9, %c0_10] : memref<128x128xf32, #tpu.memory_space<vmem>>, vector<128x128xf32>
    tpu.vector_store %arg8[%c0_9, %c0_10], %9 {strides = array<i32>} : memref<128x128xf32, #tpu.memory_space<vmem>>, vector<128x128xf32>,
    %c0_i32_11 = arith.constant 0 : i32
    %11 = arith.cmpi eq, %arg1, %c0_i32_11 : i32
    %12 = arith.extui %11 : i1 to i32
    %c0_i32_12 = arith.constant 0 : i32
    %13 = arith.cmpi ne, %12, %c0_i32_12 : i32
    scf.if %13 {
      %c0_13 = arith.constant 0 : index
      %c0_14 = arith.constant 0 : index
      %14 = memref.load %arg6[%c0_13, %c0_14] : memref<1x1xf32, #tpu.memory_space<smem>>
      %c0_15 = arith.constant 0 : index
      %c0_16 = arith.constant 0 : index
      %15 = vector.load %arg8[%c0_15, %c0_16] : memref<128x128xf32, #tpu.memory_space<vmem>>, vector<128x128xf32>
      %c0_17 = arith.constant 0 : index
      %c0_18 = arith.constant 0 : index
      %16 = vector.load %arg5[%c0_17, %c0_18] : memref<1x128xf32, #tpu.memory_space<vmem>>, vector<1x128xf32>
      %17 = vector.broadcast %16 : vector<1x128xf32> to vector<128x128xf32>
      %18 = arith.addf %15, %17 : vector<128x128xf32>
      %cst_19 = arith.constant 0.000000e+00 : f32
      %19 = vector.broadcast %cst_19 : f32 to vector<128x128xf32>
      %20 = arith.cmpf ogt, %18, %19 : vector<128x128xf32>
      %21 = vector.broadcast %14 : f32 to vector<128x128xf32>
      %22 = arith.mulf %21, %18 : vector<128x128xf32>
      %23 = arith.select %20, %18, %22 : vector<128x128xi1>, vector<128x128xf32>
      %c0_20 = arith.constant 0 : index
      %c0_21 = arith.constant 0 : index
      %24 = vector.load %arg7[%c0_20, %c0_21] : memref<128x128xf32, #tpu.memory_space<vmem>>, vector<128x128xf32>
      tpu.vector_store %arg7[%c0_20, %c0_21], %23 {strides = array<i32>} : memref<128x128xf32, #tpu.memory_space<vmem>>, vector<128x128xf32>,
    } else {
    }
    return
  }
  func.func @transform_0(%arg0: i32, %arg1: i32) -> (i32, i32) {
    %c0_i32 = arith.constant 0 : i32
    return %arg0, %arg1 : i32, i32
  }
  func.func @transform_1(%arg0: i32, %arg1: i32) -> (i32, i32) {
    %c0_i32 = arith.constant 0 : i32
    %c0_i32_0 = arith.constant 0 : i32
    return %arg1, %c0_i32 : i32, i32
  }
  func.func @transform_2(%arg0: i32, %arg1: i32) -> (i32, i32) {
    %c0_i32 = arith.constant 0 : i32
    %c0_i32_0 = arith.constant 0 : i32
    %c0_i32_1 = arith.constant 0 : i32
    return %c0_i32, %c0_i32_0 : i32, i32
  }
  func.func @transform_3(%arg0: i32, %arg1: i32) -> (i32, i32) {
    %c0_i32 = arith.constant 0 : i32
    %c0_i32_0 = arith.constant 0 : i32
    %c0_i32_1 = arith.constant 0 : i32
    return %c0_i32, %c0_i32_0 : i32, i32
  }
  func.func @transform_4(%arg0: i32, %arg1: i32) -> (i32, i32) {
    %c0_i32 = arith.constant 0 : i32
    %c0_i32_0 = arith.constant 0 : i32
    %c0_i32_1 = arith.constant 0 : i32
    return %c0_i32, %c0_i32_0 : i32, i32
  }
  func.func @transform_5(%arg0: i32, %arg1: i32) -> (i32, i32) {
    %c0_i32 = arith.constant 0 : i32
    %c0_i32_0 = arith.constant 0 : i32
    return %arg0, %c0_i32 : i32, i32
  }
}

</mosaic_0001>

<llo_original>
// kernel: tpu_custom_call.1
$region0: #{tpu_custom_call.1}
  #allocation0 [shape = 'u32[]', space=smem, size = 0x4, offset = 0x4, fixed_abs, tag = 'smem constant byte address 0x4 - core index']
  #allocation1 [shape = 'u32[144,128]{1,0:T(1,128)}', space=vmem, size = 0x12000, scoped, tag = 'internal scratch']
  #allocation2 [shape = 'f32[128,128]{1,0:T(8,128)}', space=vmem, size = 0x10000, scoped, tag = 'scratch operand']
  #allocation3 [shape = 'f32[1,1]{1,0:T(1,128)S(6)}', space=smem, size = 0x200, scoped, tag = 'scoped memory for tpu_custom_call.1']
  %s0 = inlined_call_operand.vmem [shape: f32[128,128], index: 0, kind: input, shape index: {}]
  %s1 = inlined_call_operand.vmem [shape: f32[128,64], index: 1, kind: input, shape index: {}]
  %s2 = inlined_call_operand.vmem [shape: f32[64,128], index: 2, kind: input, shape index: {}]
  %s3 = inlined_call_operand.vmem [shape: f32[1,128], index: 3, kind: input, shape index: {}]
  %s4 = inlined_call_operand.<no memory space> [shape: f32[1,1], index: 4, kind: input, shape index: {}]
  %s5 = inlined_call_operand.hbm [shape: f32[128,128], index: 5, kind: output, shape index: {}]
  %s6 = sld [smem:[#allocation0]]
  $region38: #{tpu_custom_call.1} parent=0
    _
  %s8 = ssub.s32 1, %s6
  %s9 = scalar_select 0, %s8, %s6
  %10 = sst [smem:[#allocation3]] %s4
  $region1: #{tpu_custom_call.1} parent=0
    #allocation4 [shape = 'u8[65536]{0}', space=vmem, size = 0x10000, scoped, tag = 'output window, operand 0, single buffered']
    #allocation5 [shape = 's32[1]{0}', space=sflag, size = 0x4, scoped, tag = 'scoped memory for tpu_custom_call.1']
    %11 = vsyncpa [#allocation5], 0
    // Predicated region
    $region2: #{tpu_custom_call.1} parent=1 // pred_check
      _
    $region3: #{tpu_custom_call.1} parent=1 // pred_check_branch
      %13 = sbr.rel (0) target = $region5
    $region4: #{tpu_custom_call.1} parent=1 // pred_region
      _
    $region5: #{tpu_custom_call.1} parent=1 // pred_fallthru
      _
    // Predicated region
    $region6: #{tpu_custom_call.1} parent=1 // pred_check
      _
    $region7: #{tpu_custom_call.1} parent=1 // pred_check_branch
      %15 = sbr.rel (0) target = $region9
    $region8: #{tpu_custom_call.1} parent=1 // pred_region
      _
    $region9: #{tpu_custom_call.1} parent=1 // pred_fallthru
      _
    // Predicated region
    $region10: #{tpu_custom_call.1} parent=1 // pred_check
      _
    $region11: #{tpu_custom_call.1} parent=1 // pred_check_branch
      %17 = sbr.rel (0) target = $region13
    $region12: #{tpu_custom_call.1} parent=1 // pred_region
      _
    $region13: #{tpu_custom_call.1} parent=1 // pred_fallthru
      _
    // Predicated region
    $region14: #{tpu_custom_call.1} parent=1 // pred_check
      _
    $region15: #{tpu_custom_call.1} parent=1 // pred_check_branch
      %19 = sbr.rel (0) target = $region17
    $region16: #{tpu_custom_call.1} parent=1 // pred_region
      _
    $region17: #{tpu_custom_call.1} parent=1 // pred_fallthru
      _
    // Predicated region
    $region18: #{tpu_custom_call.1} parent=1 // pred_check
      _
    $region19: #{tpu_custom_call.1} parent=1 // pred_check_branch
      %21 = sbr.rel (0) target = $region21
    $region20: #{tpu_custom_call.1} parent=1 // pred_region
      _
    $region21: #{tpu_custom_call.1} parent=1 // pred_fallthru
      _
    %p22 = scmp.eq.s32.totalorder 0, 0
    // Predicated region
    $region22: #{tpu_custom_call.1} parent=1 // pred_check
      %p23 = pneg %p22
    $region23: #{tpu_custom_call.1} parent=1 // pred_check_branch
      %25 = sbr.rel (%p23) target = $region25
    $region24: #{tpu_custom_call.1} parent=1 // pred_region
      %26 = vst [vmem:[#allocation2] sm:$0xff] 0.0
      %27 = vst [vmem:[#allocation2 + $0x8] sm:$0xff] 0.0
      %28 = vst [vmem:[#allocation2 + $0x10] sm:$0xff] 0.0
      %29 = vst [vmem:[#allocation2 + $0x18] sm:$0xff] 0.0
      %30 = vst [vmem:[#allocation2 + $0x20] sm:$0xff] 0.0
      %31 = vst [vmem:[#allocation2 + $0x28] sm:$0xff] 0.0
      %32 = vst [vmem:[#allocation2 + $0x30] sm:$0xff] 0.0
      %33 = vst [vmem:[#allocation2 + $0x38] sm:$0xff] 0.0
      %34 = vst [vmem:[#allocation2 + $0x40] sm:$0xff] 0.0
      %35 = vst [vmem:[#allocation2 + $0x48] sm:$0xff] 0.0
      %36 = vst [vmem:[#allocation2 + $0x50] sm:$0xff] 0.0
      %37 = vst [vmem:[#allocation2 + $0x58] sm:$0xff] 0.0
      %38 = vst [vmem:[#allocation2 + $0x60] sm:$0xff] 0.0
      %39 = vst [vmem:[#allocation2 + $0x68] sm:$0xff] 0.0
      %40 = vst [vmem:[#allocation2 + $0x70] sm:$0xff] 0.0
      %41 = vst [vmem:[#allocation2 + $0x78] sm:$0xff] 0.0
    $region25: #{tpu_custom_call.1} parent=1 // pred_fallthru
      _
    %v42 = vld [vmem:[%s1] sm:$0xff]
    %v43 = vld [vmem:[%s1 + $0x8] sm:$0xff]
    %v44 = vld [vmem:[%s1 + $0x10] sm:$0xff]
    %v45 = vld [vmem:[%s1 + $0x18] sm:$0xff]
    %v46 = vld [vmem:[%s1 + $0x20] sm:$0xff]
    %v47 = vld [vmem:[%s1 + $0x28] sm:$0xff]
    %v48 = vld [vmem:[%s1 + $0x30] sm:$0xff]
    %v49 = vld [vmem:[%s1 + $0x38] sm:$0xff]
    %v50 = vld [vmem:[%s1 + $0x40] sm:$0xff]
    %v51 = vld [vmem:[%s1 + $0x48] sm:$0xff]
    %v52 = vld [vmem:[%s1 + $0x50] sm:$0xff]
    %v53 = vld [vmem:[%s1 + $0x58] sm:$0xff]
    %v54 = vld [vmem:[%s1 + $0x60] sm:$0xff]
    %v55 = vld [vmem:[%s1 + $0x68] sm:$0xff]
    %v56 = vld [vmem:[%s1 + $0x70] sm:$0xff]
    %v57 = vld [vmem:[%s1 + $0x78] sm:$0xff]
    %v58 = vld [vmem:[%s2] sm:$0xff]
    %v59 = vld [vmem:[%s2 + $0x8] sm:$0xff]
    %v60 = vld [vmem:[%s2 + $0x10] sm:$0xff]
    %v61 = vld [vmem:[%s2 + $0x18] sm:$0xff]
    %v62 = vld [vmem:[%s2 + $0x20] sm:$0xff]
    %v63 = vld [vmem:[%s2 + $0x28] sm:$0xff]
    %v64 = vld [vmem:[%s2 + $0x30] sm:$0xff]
    %v65 = vld [vmem:[%s2 + $0x38] sm:$0xff]
    %vm66 = vcmask 523264
    %v68 = vsel %vm66, %v42, 0
    %v71 = vsel %vm66, %v43, 0
    %v74 = vsel %vm66, %v44, 0
    %v77 = vsel %vm66, %v45, 0
    %v80 = vsel %vm66, %v46, 0
    %v83 = vsel %vm66, %v47, 0
    %v86 = vsel %vm66, %v48, 0
    %v89 = vsel %vm66, %v49, 0
    %v92 = vsel %vm66, %v50, 0
    %v95 = vsel %vm66, %v51, 0
    %v98 = vsel %vm66, %v52, 0
    %v101 = vsel %vm66, %v53, 0
    %v104 = vsel %vm66, %v54, 0
    %v107 = vsel %vm66, %v55, 0
    %v110 = vsel %vm66, %v56, 0
    %v113 = vsel %vm66, %v57, 0
    %115 = vmatprep.subr.mxu0 0.0
    %116 = vmatpush1.msra.mxu0 %v58
    %117 = vmatprep.subr.mxu0 0.0
    %118 = vmatpush1.msra.mxu0 %v59
    %119 = vmatprep.subr.mxu0 0.0
    %120 = vmatpush1.msra.mxu0 %v60
    %121 = vmatprep.subr.mxu0 0.0
    %122 = vmatpush1.msra.mxu0 %v61
    %123 = vmatprep.subr.mxu0 0.0
    %124 = vmatpush1.msra.mxu0 %v62
    %125 = vmatprep.subr.mxu0 0.0
    %126 = vmatpush1.msra.mxu0 %v63
    %127 = vmatprep.subr.mxu0 0.0
    %128 = vmatpush1.msra.mxu0 %v64
    %129 = vmatprep.subr.mxu0 0.0
    %130 = vmatpush1.msra.mxu0 %v65
    %131 = vmatprep.subr.mxu0 0.0
    %132 = vmatpush1.msra.mxu0 0.0
    %133 = vmatprep.subr.mxu0 0.0
    %134 = vmatpush1.msra.mxu0 0.0
    %135 = vmatprep.subr.mxu0 0.0
    %136 = vmatpush1.msra.mxu0 0.0
    %137 = vmatprep.subr.mxu0 0.0
    %138 = vmatpush1.msra.mxu0 0.0
    %139 = vmatprep.subr.mxu0 0.0
    %140 = vmatpush1.msra.mxu0 0.0
    %141 = vmatprep.subr.mxu0 0.0
    %142 = vmatpush1.msra.mxu0 0.0
    %143 = vmatprep.subr.mxu0 0.0
    %144 = vmatpush1.msra.mxu0 0.0
    %145 = vmatprep.subr.mxu0 0.0
    %146 = vmatpush1.msra.mxu0 0.0
    %147 = vmatprep.subr.mxu0 0.0
    %148 = vmatpush1.msra.mxu0 0.0
    %149 = vmatprep.subr.mxu0 0.0
    %150 = vmatpush1.msra.mxu0 0.0
    %151 = vmatprep.subr.mxu0 0.0
    %152 = vmatpush1.msra.mxu0 0.0
    %153 = vmatprep.subr.mxu0 0.0
    %154 = vmatpush1.msra.mxu0 0.0
    %155 = vmatprep.subr.mxu0 0.0
    %156 = vmatpush1.msra.mxu0 0.0
    %157 = vmatprep.subr.mxu0 0.0
    %158 = vmatpush1.msra.mxu0 0.0
    %159 = vmatprep.subr.mxu0 0.0
    %160 = vmatpush1.msra.mxu0 0.0
    %161 = vmatprep.subr.mxu0 0.0
    %162 = vmatpush1.msra.mxu0 0.0
    %163 = vmatprep.subr.mxu0 0.0
    %164 = vmatpush1.msra.mxu0 0.0
    %165 = vmatprep.subr.mxu0 0.0
    %166 = vmatpush1.msra.mxu0 0.0
    %167 = vmatprep.subr.mxu0 0.0
    %168 = vmatpush1.msra.mxu0 0.0
    %169 = vmatprep.subr.mxu0 0.0
    %170 = vmatpush1.msra.mxu0 0.0
    %171 = vmatprep.subr.mxu0 0.0
    %172 = vmatpush1.msra.mxu0 0.0
    %173 = vmatprep.subr.mxu0 0.0
    %174 = vmatpush1.msra.mxu0 0.0
    %175 = vmatprep.subr.mxu0 0.0
    %176 = vmatpush1.msra.mxu0 0.0
    %177 = vmatprep.subr.mxu0 0.0
    %178 = vmatpush1.msra.mxu0 0.0
    %179 = vmatprep.mubr.f32.mxu0 0.0
    %180 = vmatmul.mubr.f32.gmra.mrb[0].mxu0 %v68
    %v181 = vpop.f32.mrb[0].mxu0
    %v182 = vadd.f32 0.0, %v181
    %v183 = vpop.f32.mrb[0].mxu0
    %184 = vmatprep.mubr.f32.mxu0 0.0
    %185 = vmatmul.mubr.f32.gmra.mrb[0].mxu0 %v71
    %v186 = vpop.f32.mrb[0].mxu0
    %v187 = vadd.f32 0.0, %v186
    %v188 = vpop.f32.mrb[0].mxu0
    %189 = vmatprep.mubr.f32.mxu0 0.0
    %190 = vmatmul.mubr.f32.gmra.mrb[0].mxu0 %v74
    %v191 = vpop.f32.mrb[0].mxu0
    %v192 = vadd.f32 0.0, %v191
    %v193 = vpop.f32.mrb[0].mxu0
    %194 = vmatprep.mubr.f32.mxu0 0.0
    %195 = vmatmul.mubr.f32.gmra.mrb[0].mxu0 %v77
    %v196 = vpop.f32.mrb[0].mxu0
    %v197 = vadd.f32 0.0, %v196
    %v198 = vpop.f32.mrb[0].mxu0
    %199 = vmatprep.mubr.f32.mxu0 0.0
    %200 = vmatmul.mubr.f32.gmra.mrb[0].mxu0 %v80
    %v201 = vpop.f32.mrb[0].mxu0
    %v202 = vadd.f32 0.0, %v201
    %v203 = vpop.f32.mrb[0].mxu0
    %204 = vmatprep.mubr.f32.mxu0 0.0
    %205 = vmatmul.mubr.f32.gmra.mrb[0].mxu0 %v83
    %v206 = vpop.f32.mrb[0].mxu0
    %v207 = vadd.f32 0.0, %v206
    %v208 = vpop.f32.mrb[0].mxu0
    %209 = vmatprep.mubr.f32.mxu0 0.0
    %210 = vmatmul.mubr.f32.gmra.mrb[0].mxu0 %v86
    %v211 = vpop.f32.mrb[0].mxu0
    %v212 = vadd.f32 0.0, %v211
    %v213 = vpop.f32.mrb[0].mxu0
    %214 = vmatprep.mubr.f32.mxu0 0.0
    %215 = vmatmul.mubr.f32.gmra.mrb[0].mxu0 %v89
    %v216 = vpop.f32.mrb[0].mxu0
    %v217 = vadd.f32 0.0, %v216
    %v218 = vpop.f32.mrb[0].mxu0
    %219 = vmatprep.mubr.f32.mxu0 0.0
    %220 = vmatmul.mubr.f32.gmra.mrb[0].mxu0 %v92
    %v221 = vpop.f32.mrb[0].mxu0
    %v222 = vadd.f32 0.0, %v221
    %v223 = vpop.f32.mrb[0].mxu0
    %224 = vmatprep.mubr.f32.mxu0 0.0
    %225 = vmatmul.mubr.f32.gmra.mrb[0].mxu0 %v95
    %v226 = vpop.f32.mrb[0].mxu0
    %v227 = vadd.f32 0.0, %v226
    %v228 = vpop.f32.mrb[0].mxu0
    %229 = vmatprep.mubr.f32.mxu0 0.0
    %230 = vmatmul.mubr.f32.gmra.mrb[0].mxu0 %v98
    %v231 = vpop.f32.mrb[0].mxu0
    %v232 = vadd.f32 0.0, %v231
    %v233 = vpop.f32.mrb[0].mxu0
    %234 = vmatprep.mubr.f32.mxu0 0.0
    %235 = vmatmul.mubr.f32.gmra.mrb[0].mxu0 %v101
    %v236 = vpop.f32.mrb[0].mxu0
    %v237 = vadd.f32 0.0, %v236
    %v238 = vpop.f32.mrb[0].mxu0
    %239 = vmatprep.mubr.f32.mxu0 0.0
    %240 = vmatmul.mubr.f32.gmra.mrb[0].mxu0 %v104
    %v241 = vpop.f32.mrb[0].mxu0
    %v242 = vadd.f32 0.0, %v241
    %v243 = vpop.f32.mrb[0].mxu0
    %244 = vmatprep.mubr.f32.mxu0 0.0
    %245 = vmatmul.mubr.f32.gmra.mrb[0].mxu0 %v107
    %v246 = vpop.f32.mrb[0].mxu0
    %v247 = vadd.f32 0.0, %v246
    %v248 = vpop.f32.mrb[0].mxu0
    %249 = vmatprep.mubr.f32.mxu0 0.0
    %250 = vmatmul.mubr.f32.gmra.mrb[0].mxu0 %v110
    %v251 = vpop.f32.mrb[0].mxu0
    %v252 = vadd.f32 0.0, %v251
    %v253 = vpop.f32.mrb[0].mxu0
    %254 = vmatprep.mubr.f32.mxu0 0.0
    %255 = vmatmul.mubr.f32.gmra.mrb[0].mxu0 %v113
    %v256 = vpop.f32.mrb[0].mxu0
    %v257 = vadd.f32 0.0, %v256
    %v258 = vpop.f32.mrb[0].mxu0
    %259 = vdwg.mxu0
    %v260 = vld [vmem:[#allocation2] sm:$0xff]
    %v261 = vld [vmem:[#allocation2 + $0x8] sm:$0xff]
    %v262 = vld [vmem:[#allocation2 + $0x10] sm:$0xff]
    %v263 = vld [vmem:[#allocation2 + $0x18] sm:$0xff]
    %v264 = vld [vmem:[#allocation2 + $0x20] sm:$0xff]
    %v265 = vld [vmem:[#allocation2 + $0x28] sm:$0xff]
    %v266 = vld [vmem:[#allocation2 + $0x30] sm:$0xff]
    %v267 = vld [vmem:[#allocation2 + $0x38] sm:$0xff]
    %v268 = vld [vmem:[#allocation2 + $0x40] sm:$0xff]
    %v269 = vld [vmem:[#allocation2 + $0x48] sm:$0xff]
    %v270 = vld [vmem:[#allocation2 + $0x50] sm:$0xff]
    %v271 = vld [vmem:[#allocation2 + $0x58] sm:$0xff]
    %v272 = vld [vmem:[#allocation2 + $0x60] sm:$0xff]
    %v273 = vld [vmem:[#allocation2 + $0x68] sm:$0xff]
    %v274 = vld [vmem:[#allocation2 + $0x70] sm:$0xff]
    %v275 = vld [vmem:[#allocation2 + $0x78] sm:$0xff]
    %v276 = vld [vmem:[%s0] sm:$0xff]
    %v277 = vld [vmem:[%s0 + $0x8] sm:$0xff]
    %v278 = vld [vmem:[%s0 + $0x10] sm:$0xff]
    %v279 = vld [vmem:[%s0 + $0x18] sm:$0xff]
    %v280 = vld [vmem:[%s0 + $0x20] sm:$0xff]
    %v281 = vld [vmem:[%s0 + $0x28] sm:$0xff]
    %v282 = vld [vmem:[%s0 + $0x30] sm:$0xff]
    %v283 = vld [vmem:[%s0 + $0x38] sm:$0xff]
    %v284 = vld [vmem:[%s0 + $0x40] sm:$0xff]
    %v285 = vld [vmem:[%s0 + $0x48] sm:$0xff]
    %v286 = vld [vmem:[%s0 + $0x50] sm:$0xff]
    %v287 = vld [vmem:[%s0 + $0x58] sm:$0xff]
    %v288 = vld [vmem:[%s0 + $0x60] sm:$0xff]
    %v289 = vld [vmem:[%s0 + $0x68] sm:$0xff]
    %v290 = vld [vmem:[%s0 + $0x70] sm:$0xff]
    %v291 = vld [vmem:[%s0 + $0x78] sm:$0xff]
    %292 = vmatprep.subr.mxu0 0.0
    %293 = vmatpush1.msra.mxu0 %v182
    %294 = vmatprep.subr.mxu0 0.0
    %295 = vmatpush1.msra.mxu0 %v187
    %296 = vmatprep.subr.mxu0 0.0
    %297 = vmatpush1.msra.mxu0 %v192
    %298 = vmatprep.subr.mxu0 0.0
    %299 = vmatpush1.msra.mxu0 %v197
    %300 = vmatprep.subr.mxu0 0.0
    %301 = vmatpush1.msra.mxu0 %v202
    %302 = vmatprep.subr.mxu0 0.0
    %303 = vmatpush1.msra.mxu0 %v207
    %304 = vmatprep.subr.mxu0 0.0
    %305 = vmatpush1.msra.mxu0 %v212
    %306 = vmatprep.subr.mxu0 0.0
    %307 = vmatpush1.msra.mxu0 %v217
    %308 = vmatprep.subr.mxu0 0.0
    %309 = vmatpush1.msra.mxu0 %v222
    %310 = vmatprep.subr.mxu0 0.0
    %311 = vmatpush1.msra.mxu0 %v227
    %312 = vmatprep.subr.mxu0 0.0
    %313 = vmatpush1.msra.mxu0 %v232
    %314 = vmatprep.subr.mxu0 0.0
    %315 = vmatpush1.msra.mxu0 %v237
    %316 = vmatprep.subr.mxu0 0.0
    %317 = vmatpush1.msra.mxu0 %v242
    %318 = vmatprep.subr.mxu0 0.0
    %319 = vmatpush1.msra.mxu0 %v247
    %320 = vmatprep.subr.mxu0 0.0
    %321 = vmatpush1.msra.mxu0 %v252
    %322 = vmatprep.subr.mxu0 0.0
    %323 = vmatpush1.msra.mxu0 %v257
    %324 = vmatprep.subr.mxu0 0.0
    %325 = vmatpush1.msra.mxu0 0.0
    %326 = vmatprep.subr.mxu0 0.0
    %327 = vmatpush1.msra.mxu0 0.0
    %328 = vmatprep.subr.mxu0 0.0
    %329 = vmatpush1.msra.mxu0 0.0
    %330 = vmatprep.subr.mxu0 0.0
    %331 = vmatpush1.msra.mxu0 0.0
    %332 = vmatprep.subr.mxu0 0.0
    %333 = vmatpush1.msra.mxu0 0.0
    %334 = vmatprep.subr.mxu0 0.0
    %335 = vmatpush1.msra.mxu0 0.0
    %336 = vmatprep.subr.mxu0 0.0
    %337 = vmatpush1.msra.mxu0 0.0
    %338 = vmatprep.subr.mxu0 0.0
    %339 = vmatpush1.msra.mxu0 0.0
    %340 = vmatprep.subr.mxu0 0.0
    %341 = vmatpush1.msra.mxu0 0.0
    %342 = vmatprep.subr.mxu0 0.0
    %343 = vmatpush1.msra.mxu0 0.0
    %344 = vmatprep.subr.mxu0 0.0
    %345 = vmatpush1.msra.mxu0 0.0
    %346 = vmatprep.subr.mxu0 0.0
    %347 = vmatpush1.msra.mxu0 0.0
    %348 = vmatprep.subr.mxu0 0.0
    %349 = vmatpush1.msra.mxu0 0.0
    %350 = vmatprep.subr.mxu0 0.0
    %351 = vmatpush1.msra.mxu0 0.0
    %352 = vmatprep.subr.mxu0 0.0
    %353 = vmatpush1.msra.mxu0 0.0
    %354 = vmatprep.subr.mxu0 0.0
    %355 = vmatpush1.msra.mxu0 0.0
    %356 = vmatprep.mubr.f32.mxu0 0.0
    %357 = vmatmul.mubr.f32.gmra.mrb[0].mxu0 %v276
    %v358 = vpop.f32.mrb[0].mxu0
    %v359 = vadd.f32 0.0, %v358
    %v360 = vpop.f32.mrb[0].mxu0
    %361 = vmatprep.mubr.f32.mxu0 0.0
    %362 = vmatmul.mubr.f32.gmra.mrb[0].mxu0 %v277
    %v363 = vpop.f32.mrb[0].mxu0
    %v364 = vadd.f32 0.0, %v363
    %v365 = vpop.f32.mrb[0].mxu0
    %366 = vmatprep.mubr.f32.mxu0 0.0
    %367 = vmatmul.mubr.f32.gmra.mrb[0].mxu0 %v278
    %v368 = vpop.f32.mrb[0].mxu0
    %v369 = vadd.f32 0.0, %v368
    %v370 = vpop.f32.mrb[0].mxu0
    %371 = vmatprep.mubr.f32.mxu0 0.0
    %372 = vmatmul.mubr.f32.gmra.mrb[0].mxu0 %v279
    %v373 = vpop.f32.mrb[0].mxu0
    %v374 = vadd.f32 0.0, %v373
    %v375 = vpop.f32.mrb[0].mxu0
    %376 = vmatprep.mubr.f32.mxu0 0.0
    %377 = vmatmul.mubr.f32.gmra.mrb[0].mxu0 %v280
    %v378 = vpop.f32.mrb[0].mxu0
    %v379 = vadd.f32 0.0, %v378
    %v380 = vpop.f32.mrb[0].mxu0
    %381 = vmatprep.mubr.f32.mxu0 0.0
    %382 = vmatmul.mubr.f32.gmra.mrb[0].mxu0 %v281
    %v383 = vpop.f32.mrb[0].mxu0
    %v384 = vadd.f32 0.0, %v383
    %v385 = vpop.f32.mrb[0].mxu0
    %386 = vmatprep.mubr.f32.mxu0 0.0
    %387 = vmatmul.mubr.f32.gmra.mrb[0].mxu0 %v282
    %v388 = vpop.f32.mrb[0].mxu0
    %v389 = vadd.f32 0.0, %v388
    %v390 = vpop.f32.mrb[0].mxu0
    %391 = vmatprep.mubr.f32.mxu0 0.0
    %392 = vmatmul.mubr.f32.gmra.mrb[0].mxu0 %v283
    %v393 = vpop.f32.mrb[0].mxu0
    %v394 = vadd.f32 0.0, %v393
    %v395 = vpop.f32.mrb[0].mxu0
    %396 = vmatprep.mubr.f32.mxu0 0.0
    %397 = vmatmul.mubr.f32.gmra.mrb[0].mxu0 %v284
    %v398 = vpop.f32.mrb[0].mxu0
    %v399 = vadd.f32 0.0, %v398
    %v400 = vpop.f32.mrb[0].mxu0
    %401 = vmatprep.mubr.f32.mxu0 0.0
    %402 = vmatmul.mubr.f32.gmra.mrb[0].mxu0 %v285
    %v403 = vpop.f32.mrb[0].mxu0
    %v404 = vadd.f32 0.0, %v403
    %v405 = vpop.f32.mrb[0].mxu0
    %406 = vmatprep.mubr.f32.mxu0 0.0
    %407 = vmatmul.mubr.f32.gmra.mrb[0].mxu0 %v286
    %v408 = vpop.f32.mrb[0].mxu0
    %v409 = vadd.f32 0.0, %v408
    %v410 = vpop.f32.mrb[0].mxu0
    %411 = vmatprep.mubr.f32.mxu0 0.0
    %412 = vmatmul.mubr.f32.gmra.mrb[0].mxu0 %v287
    %v413 = vpop.f32.mrb[0].mxu0
    %v414 = vadd.f32 0.0, %v413
    %v415 = vpop.f32.mrb[0].mxu0
    %416 = vmatprep.mubr.f32.mxu0 0.0
    %417 = vmatmul.mubr.f32.gmra.mrb[0].mxu0 %v288
    %v418 = vpop.f32.mrb[0].mxu0
    %v419 = vadd.f32 0.0, %v418
    %v420 = vpop.f32.mrb[0].mxu0
    %421 = vmatprep.mubr.f32.mxu0 0.0
    %422 = vmatmul.mubr.f32.gmra.mrb[0].mxu0 %v289
    %v423 = vpop.f32.mrb[0].mxu0
    %v424 = vadd.f32 0.0, %v423
    %v425 = vpop.f32.mrb[0].mxu0
    %426 = vmatprep.mubr.f32.mxu0 0.0
    %427 = vmatmul.mubr.f32.gmra.mrb[0].mxu0 %v290
    %v428 = vpop.f32.mrb[0].mxu0
    %v429 = vadd.f32 0.0, %v428
    %v430 = vpop.f32.mrb[0].mxu0
    %431 = vmatprep.mubr.f32.mxu0 0.0
    %432 = vmatmul.mubr.f32.gmra.mrb[0].mxu0 %v291
    %v433 = vpop.f32.mrb[0].mxu0
    %v434 = vadd.f32 0.0, %v433
    %v435 = vpop.f32.mrb[0].mxu0
    %436 = vdwg.mxu0
    %v437 = vadd.f32 %v260, %v359
    %v438 = vadd.f32 %v261, %v364
    %v439 = vadd.f32 %v262, %v369
    %v440 = vadd.f32 %v263, %v374
    %v441 = vadd.f32 %v264, %v379
    %v442 = vadd.f32 %v265, %v384
    %v443 = vadd.f32 %v266, %v389
    %v444 = vadd.f32 %v267, %v394
    %v445 = vadd.f32 %v268, %v399
    %v446 = vadd.f32 %v269, %v404
    %v447 = vadd.f32 %v270, %v409
    %v448 = vadd.f32 %v271, %v414
    %v449 = vadd.f32 %v272, %v419
    %v450 = vadd.f32 %v273, %v424
    %v451 = vadd.f32 %v274, %v429
    %v452 = vadd.f32 %v275, %v434
    %453 = vst [vmem:[#allocation2] sm:$0xff] %v437
    %454 = vst [vmem:[#allocation2 + $0x8] sm:$0xff] %v438
    %455 = vst [vmem:[#allocation2 + $0x10] sm:$0xff] %v439
    %456 = vst [vmem:[#allocation2 + $0x18] sm:$0xff] %v440
    %457 = vst [vmem:[#allocation2 + $0x20] sm:$0xff] %v441
    %458 = vst [vmem:[#allocation2 + $0x28] sm:$0xff] %v442
    %459 = vst [vmem:[#allocation2 + $0x30] sm:$0xff] %v443
    %460 = vst [vmem:[#allocation2 + $0x38] sm:$0xff] %v444
    %461 = vst [vmem:[#allocation2 + $0x40] sm:$0xff] %v445
    %462 = vst [vmem:[#allocation2 + $0x48] sm:$0xff] %v446
    %463 = vst [vmem:[#allocation2 + $0x50] sm:$0xff] %v447
    %464 = vst [vmem:[#allocation2 + $0x58] sm:$0xff] %v448
    %465 = vst [vmem:[#allocation2 + $0x60] sm:$0xff] %v449
    %466 = vst [vmem:[#allocation2 + $0x68] sm:$0xff] %v450
    %467 = vst [vmem:[#allocation2 + $0x70] sm:$0xff] %v451
    %468 = vst [vmem:[#allocation2 + $0x78] sm:$0xff] %v452
    // Predicated region
    $region26: #{tpu_custom_call.1} parent=1 // pred_check
      %p469 = pneg %p22
    $region27: #{tpu_custom_call.1} parent=1 // pred_check_branch
      %471 = sbr.rel (%p469) target = $region29
    $region28: #{tpu_custom_call.1} parent=1 // pred_region
      %s472 = sld [smem:[#allocation3]]
      %v473 = vld [vmem:[#allocation2] sm:$0xff]
      %v474 = vld [vmem:[#allocation2 + $0x8] sm:$0xff]
      %v475 = vld [vmem:[#allocation2 + $0x10] sm:$0xff]
      %v476 = vld [vmem:[#allocation2 + $0x18] sm:$0xff]
      %v477 = vld [vmem:[#allocation2 + $0x20] sm:$0xff]
      %v478 = vld [vmem:[#allocation2 + $0x28] sm:$0xff]
      %v479 = vld [vmem:[#allocation2 + $0x30] sm:$0xff]
      %v480 = vld [vmem:[#allocation2 + $0x38] sm:$0xff]
      %v481 = vld [vmem:[#allocation2 + $0x40] sm:$0xff]
      %v482 = vld [vmem:[#allocation2 + $0x48] sm:$0xff]
      %v483 = vld [vmem:[#allocation2 + $0x50] sm:$0xff]
      %v484 = vld [vmem:[#allocation2 + $0x58] sm:$0xff]
      %v485 = vld [vmem:[#allocation2 + $0x60] sm:$0xff]
      %v486 = vld [vmem:[#allocation2 + $0x68] sm:$0xff]
      %v487 = vld [vmem:[#allocation2 + $0x70] sm:$0xff]
      %v488 = vld [vmem:[#allocation2 + $0x78] sm:$0xff]
      %v489 = vld [vmem:[%s3] sm:$0x1]
      %v491 = vlaneseq
      %v492 = vshrl.u32 %v491, 7
      %v493 = vsub.s32 0, %v492
      %v494 = vrot.slane %v489, %v493
      %v496 = vadd.f32 %v473, %v494
      %v497 = vadd.f32 %v474, %v494
      %v498 = vadd.f32 %v475, %v494
      %v499 = vadd.f32 %v476, %v494
      %v500 = vadd.f32 %v477, %v494
      %v501 = vadd.f32 %v478, %v494
      %v502 = vadd.f32 %v479, %v494
      %v503 = vadd.f32 %v480, %v494
      %v504 = vadd.f32 %v481, %v494
      %v505 = vadd.f32 %v482, %v494
      %v506 = vadd.f32 %v483, %v494
      %v507 = vadd.f32 %v484, %v494
      %v508 = vadd.f32 %v485, %v494
      %v509 = vadd.f32 %v486, %v494
      %v510 = vadd.f32 %v487, %v494
      %v511 = vadd.f32 %v488, %v494
      %vm512 = vcmp.gt.f32.partialorder %v496, 0.0
      %vm513 = vcmp.gt.f32.partialorder %v497, 0.0
      %vm514 = vcmp.gt.f32.partialorder %v498, 0.0
      %vm515 = vcmp.gt.f32.partialorder %v499, 0.0
      %vm516 = vcmp.gt.f32.partialorder %v500, 0.0
      %vm517 = vcmp.gt.f32.partialorder %v501, 0.0
      %vm518 = vcmp.gt.f32.partialorder %v502, 0.0
      %vm519 = vcmp.gt.f32.partialorder %v503, 0.0
      %vm520 = vcmp.gt.f32.partialorder %v504, 0.0
      %vm521 = vcmp.gt.f32.partialorder %v505, 0.0
      %vm522 = vcmp.gt.f32.partialorder %v506, 0.0
      %vm523 = vcmp.gt.f32.partialorder %v507, 0.0
      %vm524 = vcmp.gt.f32.partialorder %v508, 0.0
      %vm525 = vcmp.gt.f32.partialorder %v509, 0.0
      %vm526 = vcmp.gt.f32.partialorder %v510, 0.0
      %vm527 = vcmp.gt.f32.partialorder %v511, 0.0
      %v528 = vstv %s472
      %v529 = vmul.f32 %v528, %v496
      %v530 = vmul.f32 %v528, %v497
      %v531 = vmul.f32 %v528, %v498
      %v532 = vmul.f32 %v528, %v499
      %v533 = vmul.f32 %v528, %v500
      %v534 = vmul.f32 %v528, %v501
      %v535 = vmul.f32 %v528, %v502
      %v536 = vmul.f32 %v528, %v503
      %v537 = vmul.f32 %v528, %v504
      %v538 = vmul.f32 %v528, %v505
      %v539 = vmul.f32 %v528, %v506
      %v540 = vmul.f32 %v528, %v507
      %v541 = vmul.f32 %v528, %v508
      %v542 = vmul.f32 %v528, %v509
      %v543 = vmul.f32 %v528, %v510
      %v544 = vmul.f32 %v528, %v511
      %v545 = vsel %vm512, %v496, %v529
      %v546 = vsel %vm513, %v497, %v530
      %v547 = vsel %vm514, %v498, %v531
      %v548 = vsel %vm515, %v499, %v532
      %v549 = vsel %vm516, %v500, %v533
      %v550 = vsel %vm517, %v501, %v534
      %v551 = vsel %vm518, %v502, %v535
      %v552 = vsel %vm519, %v503, %v536
      %v553 = vsel %vm520, %v504, %v537
      %v554 = vsel %vm521, %v505, %v538
      %v555 = vsel %vm522, %v506, %v539
      %v556 = vsel %vm523, %v507, %v540
      %v557 = vsel %vm524, %v508, %v541
      %v558 = vsel %vm525, %v509, %v542
      %v559 = vsel %vm526, %v510, %v543
      %v560 = vsel %vm527, %v511, %v544
      %561 = vst [vmem:[#allocation4] sm:$0xff] %v545
      %562 = vst [vmem:[#allocation4 + $0x8] sm:$0xff] %v546
      %563 = vst [vmem:[#allocation4 + $0x10] sm:$0xff] %v547
      %564 = vst [vmem:[#allocation4 + $0x18] sm:$0xff] %v548
      %565 = vst [vmem:[#allocation4 + $0x20] sm:$0xff] %v549
      %566 = vst [vmem:[#allocation4 + $0x28] sm:$0xff] %v550
      %567 = vst [vmem:[#allocation4 + $0x30] sm:$0xff] %v551
      %568 = vst [vmem:[#allocation4 + $0x38] sm:$0xff] %v552
      %569 = vst [vmem:[#allocation4 + $0x40] sm:$0xff] %v553
      %570 = vst [vmem:[#allocation4 + $0x48] sm:$0xff] %v554
      %571 = vst [vmem:[#allocation4 + $0x50] sm:$0xff] %v555
      %572 = vst [vmem:[#allocation4 + $0x58] sm:$0xff] %v556
      %573 = vst [vmem:[#allocation4 + $0x60] sm:$0xff] %v557
      %574 = vst [vmem:[#allocation4 + $0x68] sm:$0xff] %v558
      %575 = vst [vmem:[#allocation4 + $0x70] sm:$0xff] %v559
      %576 = vst [vmem:[#allocation4 + $0x78] sm:$0xff] %v560
    $region29: #{tpu_custom_call.1} parent=1 // pred_fallthru
      _
    // Predicated region
    $region30: #{tpu_custom_call.1} parent=1 // pred_check
      _
    $region31: #{tpu_custom_call.1} parent=1 // pred_check_branch
      %578 = sbr.rel (0) target = $region33
    $region32: #{tpu_custom_call.1} parent=1 // pred_region
      %s580 = ssub.s32 2048, 2048
      %581 = vsyncadd [#allocation5], %s580
      %s582 = sshll.u32 [#allocation4], 4
      %s583 = int_to_ptr.vmem [resolvable:$true] %s582
      %588 = dma.vmem_to_hbm [thread:$0]  %s583, 2048, %s5, [#allocation5], 128, 128, 8
    $region33: #{tpu_custom_call.1} parent=1 // pred_fallthru
      _
    // Predicated region
    $region34: #{tpu_custom_call.1} parent=1 // pred_check
      _
    $region35: #{tpu_custom_call.1} parent=1 // pred_check_branch
      %590 = sbr.rel (0) target = $region37
    $region36: #{tpu_custom_call.1} parent=1 // pred_region
      %591 = dma.done [#allocation5], 2048
    $region37: #{tpu_custom_call.1} parent=1 // pred_fallthru
      _
    %592 = vsyncpa [#allocation5], 1

</llo_original>
